<compile_context>
chip_gen: v6e
topology: v6e:2x2x1
jax: 0.10.0
libtpu: 0.0.40
codegen_flags: <defaults>
</compile_context>

<pallas_src>
import functools

import jax
import jax.numpy as jnp
from jax.experimental import pallas as pl
from jax.experimental.pallas import tpu as pltpu


def _round_up(x, m):
    return ((x + m - 1) // m) * m


def _pick_tile_rows(B, C):
    """Pick a batch tile (multiple of 8 sublanes) of ~2 MiB of f32."""
    target_bytes = 2 * 1024 * 1024
    rows = max(8, target_bytes // (C * 4))
    rows = max(8, (rows // 8) * 8)          # multiple of 8, at least 8
    rows = min(rows, 1024)                  # keep double-buffered VMEM modest
    rows = min(rows, _round_up(B, 8))       # no bigger than the padded batch
    return rows


def _reduce_kernel(x_ref, s_ref, *, num_rows, tile_rows, num_classes):
    # x_ref: (tile_rows, C) f32; s_ref: (1, 1) f32 resident accumulator.
    i = pl.program_id(0)

    @pl.when(i == 0)
    def _init():
        s_ref[...] = jnp.zeros_like(s_ref)

    x = x_ref[...]                                                   # (T, C)
    row_max = jnp.max(x, axis=-1, keepdims=True)                     # (T, 1)
    lse = row_max + jnp.log(
        jnp.sum(jnp.exp(x - row_max), axis=-1, keepdims=True))       # (T, 1)
    row_mean = jnp.sum(x, axis=-1, keepdims=True) * (1.0 / num_classes)
    contrib = row_mean - lse                                         # (T, 1)

    # Mask rows added by batch padding.
    row_ids = i * tile_rows + jax.lax.broadcasted_iota(
        jnp.int32, (tile_rows, 1), 0)
    contrib = jnp.where(row_ids < num_rows, contrib, 0.0)

    s_ref[...] += jnp.sum(contrib, axis=0, keepdims=True)            # (1, 1)


def _scale_kernel(s_ref, t_ref, out_ref):
    # out = -targets * s ; -s broadcast once over the whole tile.
    neg_s = -s_ref[0, 0]
    out_ref[...] = t_ref[...] * neg_s


def cross_entropy_soft_label(inputs, targets):
    """inputs, targets: (B, num_classes) -> loss (B, num_classes)."""
    B, C = inputs.shape
    assert targets.shape == (B, C)

    x = inputs.astype(jnp.float32)
    t = targets.astype(jnp.float32)

    tile_rows = _pick_tile_rows(B, C)
    nb = pl.cdiv(B, tile_rows)
    Bp = nb * tile_rows
    if Bp != B:
        x = jnp.pad(x, ((0, Bp - B), (0, 0)))
        t = jnp.pad(t, ((0, Bp - B), (0, 0)))

    # ---- pass 1: s = sum_b( mean_c(x_b) - logsumexp_c(x_b) ) ----------------
    s = pl.pallas_call(
        functools.partial(_reduce_kernel, num_rows=B, tile_rows=tile_rows,
                          num_classes=C),
        out_shape=jax.ShapeDtypeStruct((1, 1), jnp.float32),
        grid_spec=pltpu.PrefetchScalarGridSpec(
            num_scalar_prefetch=0,
            grid=(nb,),
            in_specs=[pl.BlockSpec((tile_rows, C), lambda i: (i, 0))],
            out_specs=pl.BlockSpec((1, 1), lambda i: (0, 0)),
        ),
        compiler_params=pltpu.CompilerParams(
            dimension_semantics=("arbitrary",)),
    )(x)

    # ---- pass 2: loss = -targets * s ----------------------------------------
    loss = pl.pallas_call(
        _scale_kernel,
        out_shape=jax.ShapeDtypeStruct((Bp, C), jnp.float32),
        grid_spec=pltpu.PrefetchScalarGridSpec(
            num_scalar_prefetch=0,
            grid=(nb,),
            in_specs=[pl.BlockSpec((1, 1), lambda i: (0, 0)),
                      pl.BlockSpec((tile_rows, C), lambda i: (i, 0))],
            out_specs=pl.BlockSpec((tile_rows, C), lambda i: (i, 0)),
        ),
        compiler_params=pltpu.CompilerParams(
            dimension_semantics=("parallel",)),
    )(s, t)

    if Bp != B:
        loss = loss[:B]
    return loss


if __name__ == "__main__":
    # Small shapes consistent with the module: batch=4, num_classes=32.
    B, C = 4, 32
    key = jax.random.PRNGKey(0)
    k1, k2 = jax.random.split(key)
    inputs = jax.random.normal(k1, (B, C), dtype=jnp.float32)
    # Soft labels: rows sum to 1.
    targets = jax.nn.softmax(
        jax.random.normal(k2, (B, C), dtype=jnp.float32), axis=1)

    loss = cross_entropy_soft_label(inputs, targets)
    loss = jax.block_until_ready(loss)

    # Reference matching the PyTorch forward exactly.
    log_probs = jax.nn.log_softmax(inputs, axis=1)
    s_scalar = jnp.sum(jnp.mean(log_probs, axis=1))
    expected = -targets * s_scalar

    assert loss.shape == (B, C)
    assert jnp.allclose(loss, expected, atol=1e-5, rtol=1e-5)
    print("KERNEL_OK")
</pallas_src>

<mosaic_0001>
module attributes {stable_mosaic.version = 11 : i64} {
  func.func @_reduce_kernel(%arg0: i32, %arg1: memref<8x32xf32, #tpu.memory_space<vmem>>, %arg2: memref<1x1xf32, #tpu.memory_space<vmem>>) attributes {dimension_semantics = [#tpu.dimension_semantics<arbitrary>], iteration_bounds = array<i64: 1>, scalar_prefetch = 0 : i64, scratch_operands = 0 : i64, tpu.core_type = #tpu.core_type<tc>, window_params = [{transform_indices = @transform_0, window_bounds = array<i64: 8, 32>}, {pipeline_mode = #tpu.pipeline_mode<synchronous>, transform_indices = @transform_1, window_bounds = array<i64: 1, 1>}]} {
    %c0_i32 = arith.constant 0 : i32
    %0 = arith.cmpi eq, %arg0, %c0_i32 : i32
    %1 = arith.extui %0 : i1 to i32
    %c0_i32_0 = arith.constant 0 : i32
    %2 = arith.cmpi ne, %1, %c0_i32_0 : i32
    scf.if %2 {
      %cst_11 = arith.constant 0.000000e+00 : f32
      %31 = vector.broadcast %cst_11 : f32 to vector<1x1xf32>
      %c0_12 = arith.constant 0 : index
      %c0_13 = arith.constant 0 : index
      %32 = vector.load %arg2[%c0_12, %c0_13] : memref<1x1xf32, #tpu.memory_space<vmem>>, vector<1x1xf32>
      tpu.vector_store %arg2[%c0_12, %c0_13], %31 {strides = array<i32>} : memref<1x1xf32, #tpu.memory_space<vmem>>, vector<1x1xf32>,
    } else {
    }
    %c0 = arith.constant 0 : index
    %c0_1 = arith.constant 0 : index
    %3 = vector.load %arg1[%c0, %c0_1] : memref<8x32xf32, #tpu.memory_space<vmem>>, vector<8x32xf32>
    %cst = arith.constant dense<0xFF800000> : vector<8xf32>
    %4 = vector.multi_reduction <maximumf>, %3, %cst [1] : vector<8x32xf32> to vector<8xf32>
    %5 = vector.shape_cast %4 : vector<8xf32> to vector<8x1xf32>
    %6 = vector.broadcast %5 : vector<8x1xf32> to vector<8x32xf32>
    %7 = arith.subf %3, %6 : vector<8x32xf32>
    %8 = math.exp %7 : vector<8x32xf32>
    %cst_2 = arith.constant dense<0.000000e+00> : vector<8xf32>
    %9 = vector.multi_reduction <add>, %8, %cst_2 [1] : vector<8x32xf32> to vector<8xf32>
    %10 = vector.shape_cast %9 : vector<8xf32> to vector<8x1xf32>
    %11 = math.log %10 : vector<8x1xf32>
    %12 = arith.addf %5, %11 : vector<8x1xf32>
    %cst_3 = arith.constant dense<0.000000e+00> : vector<8xf32>
    %13 = vector.multi_reduction <add>, %3, %cst_3 [1] : vector<8x32xf32> to vector<8xf32>
    %14 = vector.shape_cast %13 : vector<8xf32> to vector<8x1xf32>
    %cst_4 = arith.constant 3.125000e-02 : f32
    %15 = vector.broadcast %cst_4 : f32 to vector<8x1xf32>
    %16 = arith.mulf %14, %15 : vector<8x1xf32>
    %17 = arith.subf %16, %12 : vector<8x1xf32>
    %c8_i32 = arith.constant 8 : i32
    %18 = arith.muli %arg0, %c8_i32 : i32
    %19 = tpu.iota {dimensions = array<i32: 0>} : vector<8x1xi32>
    %20 = vector.broadcast %18 : i32 to vector<8x1xi32>
    %21 = arith.addi %20, %19 : vector<8x1xi32>
    %c4_i32 = arith.constant 4 : i32
    %22 = vector.broadcast %c4_i32 : i32 to vector<8x1xi32>
    %23 = arith.cmpi slt, %21, %22 : vector<8x1xi32>
    %cst_5 = arith.constant 0.000000e+00 : f32
    %24 = vector.broadcast %cst_5 : f32 to vector<8x1xf32>
    %25 = arith.select %23, %17, %24 : vector<8x1xi1>, vector<8x1xf32>
    %c0_6 = arith.constant 0 : index
    %c0_7 = arith.constant 0 : index
    %26 = vector.load %arg2[%c0_6, %c0_7] : memref<1x1xf32, #tpu.memory_space<vmem>>, vector<1x1xf32>
    %cst_8 = arith.constant dense<0.000000e+00> : vector<1xf32>
    %27 = vector.multi_reduction <add>, %25, %cst_8 [0] : vector<8x1xf32> to vector<1xf32>
    %28 = vector.shape_cast %27 : vector<1xf32> to vector<1x1xf32>
    %29 = arith.addf %26, %28 : vector<1x1xf32>
    %c0_9 = arith.constant 0 : index
    %c0_10 = arith.constant 0 : index
    %30 = vector.load %arg2[%c0_9, %c0_10] : memref<1x1xf32, #tpu.memory_space<vmem>>, vector<1x1xf32>
    tpu.vector_store %arg2[%c0_9, %c0_10], %29 {strides = array<i32>} : memref<1x1xf32, #tpu.memory_space<vmem>>, vector<1x1xf32>,
    return
  }
  func.func @transform_0(%arg0: i32) -> (i32, i32) {
    %c0_i32 = arith.constant 0 : i32
    %c0_i32_0 = arith.constant 0 : i32
    return %arg0, %c0_i32 : i32, i32
  }
  func.func @transform_1(%arg0: i32) -> (i32, i32) {
    %c0_i32 = arith.constant 0 : i32
    %c0_i32_0 = arith.constant 0 : i32
    %c0_i32_1 = arith.constant 0 : i32
    return %c0_i32, %c0_i32_0 : i32, i32
  }
}

</mosaic_0001>

<llo_original>
// kernel: tpu_custom_call.1
$region0: #{tpu_custom_call.1}
  #allocation0 [shape = 'u32[]', space=smem, size = 0x4, offset = 0x4, fixed_abs, tag = 'smem constant byte address 0x4 - core index']
  #allocation1 [shape = 'u32[144,128]{1,0:T(1,128)}', space=vmem, size = 0x12000, scoped, tag = 'internal scratch']
  %s0 = inlined_call_operand.hbm [shape: f32[8,32], index: 0, kind: input, shape index: {}]
  %s1 = inlined_call_operand.hbm [shape: f32[1,1], index: 1, kind: output, shape index: {}]
  %s2 = sld [smem:[#allocation0]]
  $region22: #{tpu_custom_call.1} parent=0
    _
  %s4 = ssub.s32 1, %s2
  %s5 = scalar_select 0, %s4, %s2
  $region1: #{tpu_custom_call.1} parent=0
    #allocation2 [shape = 'u8[4096]{0}', space=vmem, size = 0x1000, scoped, tag = 'input window, operand 0, single buffered']
    #allocation3 [shape = 's32[1]{0}', space=sflag, size = 0x4, scoped, tag = 'scoped memory for tpu_custom_call.1']
    #allocation4 [shape = 's32[1]{0}', space=sflag, size = 0x4, scoped, tag = 'scoped memory for tpu_custom_call.1']
    #allocation5 [shape = 'u8[512]{0}', space=vmem, size = 0x400, scoped, tag = 'output window, operand 0, single buffered']
    %6 = vsyncpa [#allocation3], 0
    %7 = vsyncpa [#allocation4], 0
    // Predicated region
    $region2: #{tpu_custom_call.1} parent=1 // pred_check
      _
    $region3: #{tpu_custom_call.1} parent=1 // pred_check_branch
      %9 = sbr.rel (0) target = $region5
    $region4: #{tpu_custom_call.1} parent=1 // pred_region
      %s11 = ssub.s32 128, 128
      %12 = vsyncadd [#allocation3], %s11
      %s14 = sshll.u32 [#allocation2], 4
      %s15 = int_to_ptr.vmem [resolvable:$true] %s14
      %17 = dma.hbm_to_vmem [thread:$0]  %s0, 128, %s15, [#allocation3]
    $region5: #{tpu_custom_call.1} parent=1 // pred_fallthru
      _
    // Predicated region
    $region6: #{tpu_custom_call.1} parent=1 // pred_check
      _
    $region7: #{tpu_custom_call.1} parent=1 // pred_check_branch
      %19 = sbr.rel (0) target = $region9
    $region8: #{tpu_custom_call.1} parent=1 // pred_region
      %20 = dma.done [#allocation3], 128
    $region9: #{tpu_custom_call.1} parent=1 // pred_fallthru
      _
    %p21 = scmp.eq.s32.totalorder 0, 0
    // Predicated region
    $region10: #{tpu_custom_call.1} parent=1 // pred_check
      %p22 = pneg %p21
    $region11: #{tpu_custom_call.1} parent=1 // pred_check_branch
      %24 = sbr.rel (%p22) target = $region13
    $region12: #{tpu_custom_call.1} parent=1 // pred_region
      %vm25 = vcmask 0
      %26 = vst.msk [vmem:[#allocation5] sm:$0x1] %vm25, 0.0
    $region13: #{tpu_custom_call.1} parent=1 // pred_fallthru
      _
    %v27 = vld [vmem:[#allocation2] sm:$0xff]
    %vm28 = vcmask 261120
    %v29 = vsel %vm28, %v27, -inf
    %30 = vmax.xlane.f32.xlu0 %v29
    %v31 = vpop.xlane.xlu0 %30
    %v32 = vsub.f32 %v27, %v31
    %v33 = vmul.f32 %v32, 1.442695
    %v34 = vpow.pop %v33
    %v35 = vsel %vm28, %v34, 0.0
    %36 = vadd.xlane.f32.xlu0 %v35
    %v37 = vpop.xlane.xlu0 %36
    %v38 = vlog2.pop %v37
    %v39 = vmul.f32 %v38, 0.6931472
    %v40 = vadd.f32 %v31, %v39
    %v41 = vsel %vm28, %v27, 0.0
    %42 = vadd.xlane.f32.xlu0 %v41
    %v43 = vpop.xlane.xlu0 %42
    %v44 = vmul.f32 %v43, 0.03125
    %v45 = vsub.f32 %v44, %v40
    %s46 = smul.u32 0, 8
    %v47 = vlaneseq
    %v48 = vshrl.u32 %v47, 7
    %v49 = vstv %s46
    %v50 = vadd.s32 %v49, %v48
    %vm51 = vcmp.lt.s32.totalorder %v50, 4
    %v52 = vsel %vm51, %v45, 0.0
    %v53 = vld [vmem:[#allocation5] sm:$0x1]
    %v54 = vrot.slane %v52, 4
    %v55 = vadd.f32 %v52, %v54
    %v56 = vrot.slane %v55, 2
    %v57 = vadd.f32 %v55, %v56
    %v58 = vrot.slane %v57, 1
    %v59 = vadd.f32 %v57, %v58
    %v60 = vadd.f32 %v53, %v59
    %vm61 = vcmask 0
    %62 = vst.msk [vmem:[#allocation5] sm:$0x1] %vm61, %v60
    // Predicated region
    $region14: #{tpu_custom_call.1} parent=1 // pred_check
      _
    $region15: #{tpu_custom_call.1} parent=1 // pred_check_branch
      %64 = sbr.rel (0) target = $region17
    $region16: #{tpu_custom_call.1} parent=1 // pred_region
      %s66 = ssub.s32 16, 16
      %67 = vsyncadd [#allocation4], %s66
      %s69 = sshll.u32 [#allocation5], 4
      %s70 = int_to_ptr.vmem [resolvable:$true] %s69
      %72 = dma.vmem_to_hbm [thread:$0]  %s70, 16, %s1, [#allocation4]
    $region17: #{tpu_custom_call.1} parent=1 // pred_fallthru
      _
    // Predicated region
    $region18: #{tpu_custom_call.1} parent=1 // pred_check
      _
    $region19: #{tpu_custom_call.1} parent=1 // pred_check_branch
      %74 = sbr.rel (0) target = $region21
    $region20: #{tpu_custom_call.1} parent=1 // pred_region
      %75 = dma.done [#allocation4], 16
    $region21: #{tpu_custom_call.1} parent=1 // pred_fallthru
      _
    %76 = vsyncpa [#allocation3], 1
    %77 = vsyncpa [#allocation4], 1

</llo_original>
